<compile_context>
chip_gen: v7x
topology: tpu7x:2x2x1
jax: 0.10.0
libtpu: 0.0.40
codegen_flags: <defaults>
</compile_context>

<pallas_src>
import jax
import jax.numpy as jnp
from jax.experimental import pallas as pl
from jax.experimental.pallas import tpu as pltpu


def separator_gum_kernel(
    xf_ref,      # [tN, Fin] bf16 node features for rationale_gnn_node
    h_ref,       # [tN, H]   bf16 h_node tile
    batch_ref,   # [1, tN]   int32 graph id (== B for padding cols), lane-dense
    noise_ref,   # [1, tN]   f32 pre-differenced Gumbel noise (g1 - g0)
    w1_ref, b1_ref,     # rationale gnn stand-in: [Fin, D] bf16, [1, D] f32
    wg2_ref, bg2_ref,   # fused gate_nn: [2, D] bf16 = [wg1 ; wg1-wg0], [2, 1] f32
    wn_ref, bn_ref,     # self.nn: [H, H] bf16, [1, H] f32
    h_out_ref,   # [B, H]  accumulates sum(gate*h); finalized to mean on last step
    c_out_ref,   # [B, H]  accumulates sum(h);      finalized to mean((1-gate)*h)
    rc_ref,      # [B, 2]  accumulates [sum(gate), node count]
    pred_ref,    # [1, tN] raw gate_nn(x)[:, -1] for this node tile (lane-dense)
):
    step = pl.program_id(0)
    tn = xf_ref.shape[0]
    B = h_out_ref.shape[0]

    @pl.when(step == 0)
    def _init():
        h_out_ref[...] = jnp.zeros_like(h_out_ref)
        c_out_ref[...] = jnp.zeros_like(c_out_ref)
        rc_ref[...] = jnp.zeros_like(rc_ref)

    # --- rationale_gnn_node stand-in: node-wise Linear + ReLU -----------------
    x = jnp.dot(xf_ref[...], w1_ref[...],
                preferred_element_type=jnp.float32) + b1_ref[...]
    x = jnp.maximum(x, 0.0)                                       # [tN, D] f32
    xb = x.astype(jnp.bfloat16)

    # --- fused gate matmul: [2, D] x [tN, D]^T -> [2, tN] ---------------------
    # row 0: raw logit  wg1.x + b1          (the returned `pred`)
    # row 1: (wg1-wg0).x + (b1-b0)          (logit diff for gumbel-softmax[:,1])
    dn_bt = (((1,), (1,)), ((), ()))
    gl = jax.lax.dot_general(wg2_ref[...], xb, dn_bt,
                             preferred_element_type=jnp.float32) + bg2_ref[...]
    pred_ref[...] = gl[0:1, :]                                    # [1, tN]

    # F.gumbel_softmax(., tau=1, hard=False)[:, -1] == sigmoid(perturbed diff)
    gdiff = gl[1:2, :] + noise_ref[...]
    gate_row = pl.reciprocal(1.0 + jnp.exp(-gdiff), approx=True)  # [1, tN]

    # --- self.nn(h_node) ------------------------------------------------------
    h = jnp.dot(h_ref[...], wn_ref[...],
                preferred_element_type=jnp.float32) + bn_ref[...]  # [tN, H] f32
    hb = h.astype(jnp.bfloat16)

    # --- segment reductions with a [B, tN] one-hot ----------------------------
    seg_ids = jax.lax.broadcasted_iota(jnp.int32, (B, tn), 0)
    onehot = (batch_ref[...] == seg_ids).astype(jnp.float32)      # [B, tN]
    gated = onehot * gate_row                                      # [B, tN]

    dn_std = (((1,), (0,)), ((), ()))
    sum_gh = jax.lax.dot_general(gated.astype(jnp.bfloat16), hb, dn_std,
                                 preferred_element_type=jnp.float32)   # [B, H]
    sum_h = jax.lax.dot_general(onehot.astype(jnp.bfloat16), hb, dn_std,
                                preferred_element_type=jnp.float32)    # [B, H]
    gate_part = jnp.sum(gated, axis=1, keepdims=True)              # [B, 1]
    cnt_part = jnp.sum(onehot, axis=1, keepdims=True)              # [B, 1]

    h_out_ref[...] += sum_gh
    c_out_ref[...] += sum_h
    rc_ref[...] += jnp.concatenate([gate_part, cnt_part], axis=1)  # [B, 2]

    @pl.when(step == pl.num_programs(0) - 1)
    def _finalize():
        acc_gh = h_out_ref[...]
        acc_h = c_out_ref[...]
        counts = rc_ref[:, 1:2]
        inv = pl.reciprocal(jnp.maximum(counts, 1.0), approx=True)
        h_out_ref[...] = acc_gh * inv
        c_out_ref[...] = (acc_h - acc_gh) * inv


def separator_gum_forward(x_feats, h_node, batch, gumbel_noise, params,
                          num_graphs, *, node_tile=None):
    """Pad N to a multiple of node_tile and run a 1-D node-tiled grid."""
    N, Fin = x_feats.shape
    H = h_node.shape[1]
    D = params["w1"].shape[1]
    B = int(num_graphs)

    if node_tile is None:
        # Large tiles amortize the ~0.35 us per-grid-step overhead; cap with a
        # conservative VMEM budget so the choice is also safe on v7x (64 MiB
        # physical / 32 MiB default scoped VMEM).
        bytes_per_node = (Fin + H) * 2 + 4 + 4 + 4   # bf16 streams + i32 id + f32 noise + f32 pred
        vmem_budget = 8 * 1024 * 1024                # double-buffered node streams
        cap = max(256, min(1024, (vmem_budget // (2 * bytes_per_node)) // 256 * 256))
        node_tile = int(min(cap, ((N + 255) // 256) * 256))
    n_pad = ((N + node_tile - 1) // node_tile) * node_tile
    pad = n_pad - N

    # --- streamed node tensors (bf16) and lane-dense rows ---------------------
    xf = jnp.pad(x_feats.astype(jnp.bfloat16), ((0, pad), (0, 0)))
    hn = jnp.pad(h_node.astype(jnp.bfloat16), ((0, pad), (0, 0)))
    noise_row = jnp.pad(
        (gumbel_noise[:, 1] - gumbel_noise[:, 0]).astype(jnp.float32).reshape(1, N),
        ((0, 0), (0, pad)))
    batch_row = jnp.pad(batch.astype(jnp.int32).reshape(1, N), ((0, 0), (0, pad)),
                        constant_values=B)   # out-of-range id -> all-zero one-hot col

    # --- weights ---------------------------------------------------------------
    w1 = params["w1"].astype(jnp.bfloat16)
    b1 = params["b1"].astype(jnp.float32)
    wg = params["wg"].astype(jnp.float32)    # torch [out, in] = [2, D]
    bg = params["bg"].astype(jnp.float32)    # [1, 2]
    wg2 = jnp.concatenate([wg[1:2, :], wg[1:2, :] - wg[0:1, :]], axis=0
                          ).astype(jnp.bfloat16)                         # [2, D]
    bg2 = jnp.stack([bg[0, 1], bg[0, 1] - bg[0, 0]]).reshape(2, 1
                    ).astype(jnp.float32)                                # [2, 1]
    wn = params["wn"].astype(jnp.bfloat16)
    bn = params["bn"].astype(jnp.float32)

    grid = (n_pad // node_tile,)
    const = lambda i: (0, 0)
    in_specs = [
        pl.BlockSpec((node_tile, Fin), lambda i: (i, 0)),   # xf
        pl.BlockSpec((node_tile, H), lambda i: (i, 0)),     # h_node
        pl.BlockSpec((1, node_tile), lambda i: (0, i)),     # batch row (lane-dense)
        pl.BlockSpec((1, node_tile), lambda i: (0, i)),     # noise-diff row
        pl.BlockSpec((Fin, D), const),                      # w1
        pl.BlockSpec((1, D), const),                        # b1
        pl.BlockSpec((2, D), const),                        # wg2
        pl.BlockSpec((2, 1), const),                        # bg2
        pl.BlockSpec((H, H), const),                        # wn
        pl.BlockSpec((1, H), const),                        # bn
    ]
    out_specs = (
        pl.BlockSpec((B, H), const),                        # h_out (accumulator)
        pl.BlockSpec((B, H), const),                        # c_out (accumulator)
        pl.BlockSpec((B, 2), const),                        # [sum(gate), count]
        pl.BlockSpec((1, node_tile), lambda i: (0, i)),     # pred row (lane-dense)
    )
    out_shape = (
        jax.ShapeDtypeStruct((B, H), jnp.float32),
        jax.ShapeDtypeStruct((B, H), jnp.float32),
        jax.ShapeDtypeStruct((B, 2), jnp.float32),
        jax.ShapeDtypeStruct((1, n_pad), jnp.float32),
    )
    inputs = (xf, hn, batch_row, noise_row, w1, b1, wg2, bg2, wn, bn)

    flops = 2 * n_pad * (Fin * D + 2 * D + H * H + 2 * B * H)
    in_bytes = sum(int(a.size) * a.dtype.itemsize for a in inputs)
    out_bytes = 4 * (2 * B * H + 2 * B + n_pad)
    cost = pl.CostEstimate(flops=flops, transcendentals=n_pad,
                           bytes_accessed=in_bytes + out_bytes)

    h_out, c_out, rc, pred_row = pl.pallas_call(
        separator_gum_kernel,
        out_shape=out_shape,
        grid_spec=pltpu.PrefetchScalarGridSpec(
            num_scalar_prefetch=0,
            grid=grid,
            in_specs=in_specs,
            out_specs=out_specs,
            scratch_shapes=[]),
        compiler_params=pltpu.CompilerParams(
            dimension_semantics=("arbitrary",),
            vmem_limit_bytes=32 * 1024 * 1024),
        cost_estimate=cost,
    )(*inputs)

    r_num = rc[:, 0:1] + 1e-08
    env_num = (rc[:, 1:2] - rc[:, 0:1]) + 1e-08
    pred = pred_row[0, :N].reshape(N, 1)
    return h_out, c_out, r_num, env_num, pred


if __name__ == "__main__":
    key = jax.random.PRNGKey(0)
    N, Fin, D, H, B = 200, 16, 32, 32, 4
    ks = jax.random.split(key, 6)

    x_feats = jax.random.normal(ks[0], (N, Fin), jnp.float32)
    h_node = jax.random.normal(ks[1], (N, H), jnp.float32)
    # sorted batch vector, N//B nodes per graph -> batch[-1] + 1 == B
    batch = jnp.repeat(jnp.arange(B, dtype=jnp.int32), N // B)

    # Gumbel(0,1) noise for F.gumbel_softmax, sampled deterministically here.
    u = jax.random.uniform(ks[2], (N, 2), jnp.float32,
                           minval=1e-6, maxval=1.0 - 1e-6)
    gumbel_noise = -jnp.log(-jnp.log(u))

    params = {
        "w1": 0.1 * jax.random.normal(ks[3], (Fin, D), jnp.float32),
        "b1": 0.01 * jnp.ones((1, D), jnp.float32),
        "wg": 0.1 * jax.random.normal(ks[4], (2, D), jnp.float32),  # torch [out, in]
        "bg": jnp.zeros((1, 2), jnp.float32),
        "wn": 0.1 * jax.random.normal(ks[5], (H, H), jnp.float32),
        "bn": jnp.zeros((1, H), jnp.float32),
    }

    # Pure-JAX f32 reference of the same forward (same stand-in submodules).
    def reference():
        x = jnp.maximum(x_feats @ params["w1"] + params["b1"], 0.0)
        logits = x @ params["wg"].T + params["bg"]
        gate = jax.nn.softmax(logits + gumbel_noise, axis=-1)[:, 1:2]
        h = h_node @ params["wn"] + params["bn"]
        seg = lambda v: jax.ops.segment_sum(v, batch, num_segments=B)
        cnt = jnp.maximum(seg(jnp.ones((N, 1), jnp.float32)), 1.0)
        return (seg(gate * h) / cnt, seg((1.0 - gate) * h) / cnt,
                seg(gate) + 1e-08, seg(1.0 - gate) + 1e-08, logits[:, 1:2])

    ref = reference()

    # Run once with the adaptive (single-step) tile and once with a forced small
    # tile to also exercise the multi-step accumulation path.
    for tile in (None, 128):
        outs = separator_gum_forward(x_feats, h_node, batch, gumbel_noise,
                                     params, B, node_tile=tile)
        jax.block_until_ready(outs)
        h_out, c_out, r_num, env_num, pred = outs
        assert h_out.shape == (B, H) and c_out.shape == (B, H)
        assert r_num.shape == (B, 1) and env_num.shape == (B, 1)
        assert pred.shape == (N, 1)
        for got, want in zip(outs, ref):
            assert bool(jnp.allclose(got, want, rtol=2e-2, atol=2e-2))

    print("KERNEL_OK")
</pallas_src>

<mosaic_0001>
module attributes {stable_mosaic.version = 11 : i64} {
  func.func @separator_gum_kernel(%arg0: i32, %arg1: memref<256x16xbf16, #tpu.memory_space<vmem>>, %arg2: memref<256x32xbf16, #tpu.memory_space<vmem>>, %arg3: memref<1x256xi32, #tpu.memory_space<vmem>>, %arg4: memref<1x256xf32, #tpu.memory_space<vmem>>, %arg5: memref<16x32xbf16, #tpu.memory_space<vmem>>, %arg6: memref<1x32xf32, #tpu.memory_space<vmem>>, %arg7: memref<2x32xbf16, #tpu.memory_space<vmem>>, %arg8: memref<2x1xf32, #tpu.memory_space<vmem>>, %arg9: memref<32x32xbf16, #tpu.memory_space<vmem>>, %arg10: memref<1x32xf32, #tpu.memory_space<vmem>>, %arg11: memref<4x32xf32, #tpu.memory_space<vmem>>, %arg12: memref<4x32xf32, #tpu.memory_space<vmem>>, %arg13: memref<4x2xf32, #tpu.memory_space<vmem>>, %arg14: memref<1x256xf32, #tpu.memory_space<vmem>>) attributes {dimension_semantics = [#tpu.dimension_semantics<arbitrary>], iteration_bounds = array<i64: 1>, scalar_prefetch = 0 : i64, scratch_operands = 0 : i64, tpu.core_type = #tpu.core_type<tc>, window_params = [{transform_indices = @transform_0, window_bounds = array<i64: 256, 16>}, {transform_indices = @transform_1, window_bounds = array<i64: 256, 32>}, {transform_indices = @transform_2, window_bounds = array<i64: 1, 256>}, {transform_indices = @transform_3, window_bounds = array<i64: 1, 256>}, {pipeline_mode = #tpu.pipeline_mode<synchronous>, transform_indices = @transform_4, window_bounds = array<i64: 16, 32>}, {pipeline_mode = #tpu.pipeline_mode<synchronous>, transform_indices = @transform_5, window_bounds = array<i64: 1, 32>}, {pipeline_mode = #tpu.pipeline_mode<synchronous>, transform_indices = @transform_6, window_bounds = array<i64: 2, 32>}, {pipeline_mode = #tpu.pipeline_mode<synchronous>, transform_indices = @transform_7, window_bounds = array<i64: 2, 1>}, {pipeline_mode = #tpu.pipeline_mode<synchronous>, transform_indices = @transform_8, window_bounds = array<i64: 32, 32>}, {pipeline_mode = #tpu.pipeline_mode<synchronous>, transform_indices = @transform_9, window_bounds = array<i64: 1, 32>}, {pipeline_mode = #tpu.pipeline_mode<synchronous>, transform_indices = @transform_10, window_bounds = array<i64: 4, 32>}, {pipeline_mode = #tpu.pipeline_mode<synchronous>, transform_indices = @transform_11, window_bounds = array<i64: 4, 32>}, {pipeline_mode = #tpu.pipeline_mode<synchronous>, transform_indices = @transform_12, window_bounds = array<i64: 4, 2>}, {transform_indices = @transform_13, window_bounds = array<i64: 1, 256>}]} {
    %c0_i32 = arith.constant 0 : i32
    %0 = arith.cmpi eq, %arg0, %c0_i32 : i32
    %1 = arith.extui %0 : i1 to i32
    %c0_i32_0 = arith.constant 0 : i32
    %2 = arith.cmpi ne, %1, %c0_i32_0 : i32
    scf.if %2 {
      %cst_45 = arith.constant 0.000000e+00 : f32
      %64 = vector.broadcast %cst_45 : f32 to vector<4x32xf32>
      %c0_46 = arith.constant 0 : index
      %c0_47 = arith.constant 0 : index
      %65 = vector.load %arg11[%c0_46, %c0_47] : memref<4x32xf32, #tpu.memory_space<vmem>>, vector<4x32xf32>
      tpu.vector_store %arg11[%c0_46, %c0_47], %64 {strides = array<i32>} : memref<4x32xf32, #tpu.memory_space<vmem>>, vector<4x32xf32>,
      %cst_48 = arith.constant 0.000000e+00 : f32
      %66 = vector.broadcast %cst_48 : f32 to vector<4x32xf32>
      %c0_49 = arith.constant 0 : index
      %c0_50 = arith.constant 0 : index
      %67 = vector.load %arg12[%c0_49, %c0_50] : memref<4x32xf32, #tpu.memory_space<vmem>>, vector<4x32xf32>
      tpu.vector_store %arg12[%c0_49, %c0_50], %66 {strides = array<i32>} : memref<4x32xf32, #tpu.memory_space<vmem>>, vector<4x32xf32>,
      %cst_51 = arith.constant 0.000000e+00 : f32
      %68 = vector.broadcast %cst_51 : f32 to vector<4x2xf32>
      %c0_52 = arith.constant 0 : index
      %c0_53 = arith.constant 0 : index
      %69 = vector.load %arg13[%c0_52, %c0_53] : memref<4x2xf32, #tpu.memory_space<vmem>>, vector<4x2xf32>
      tpu.vector_store %arg13[%c0_52, %c0_53], %68 {strides = array<i32>} : memref<4x2xf32, #tpu.memory_space<vmem>>, vector<4x2xf32>,
    } else {
    }
    %c0 = arith.constant 0 : index
    %c0_1 = arith.constant 0 : index
    %3 = vector.load %arg1[%c0, %c0_1] : memref<256x16xbf16, #tpu.memory_space<vmem>>, vector<256x16xbf16>
    %c0_2 = arith.constant 0 : index
    %c0_3 = arith.constant 0 : index
    %4 = vector.load %arg5[%c0_2, %c0_3] : memref<16x32xbf16, #tpu.memory_space<vmem>>, vector<16x32xbf16>
    %cst = arith.constant dense<0.000000e+00> : vector<256x32xf32>
    %5 = tpu.matmul %3, %4, %cst {dimension_numbers = #tpu.dot_dimension_numbers<[1], [0], [0], [1], [0, 0, 1, 1], [], []>} : vector<256x16xbf16>, vector<16x32xbf16>, vector<256x32xf32> -> vector<256x32xf32>
    %c0_4 = arith.constant 0 : index
    %c0_5 = arith.constant 0 : index
    %6 = vector.load %arg6[%c0_4, %c0_5] : memref<1x32xf32, #tpu.memory_space<vmem>>, vector<1x32xf32>
    %7 = vector.broadcast %6 : vector<1x32xf32> to vector<256x32xf32>
    %8 = arith.addf %5, %7 : vector<256x32xf32>
    %cst_6 = arith.constant 0.000000e+00 : f32
    %9 = vector.broadcast %cst_6 : f32 to vector<256x32xf32>
    %10 = arith.maximumf %8, %9 : vector<256x32xf32>
    %11 = arith.truncf %10 : vector<256x32xf32> to vector<256x32xbf16>
    %c0_7 = arith.constant 0 : index
    %c0_8 = arith.constant 0 : index
    %12 = vector.load %arg7[%c0_7, %c0_8] : memref<2x32xbf16, #tpu.memory_space<vmem>>, vector<2x32xbf16>
    %cst_9 = arith.constant dense<0.000000e+00> : vector<2x256xf32>
    %13 = tpu.matmul %12, %11, %cst_9 {dimension_numbers = #tpu.dot_dimension_numbers<[1], [1], [0], [0], [0, 0, 1, 0], [], []>} : vector<2x32xbf16>, vector<256x32xbf16>, vector<2x256xf32> -> vector<2x256xf32>
    %c0_10 = arith.constant 0 : index
    %c0_11 = arith.constant 0 : index
    %14 = vector.load %arg8[%c0_10, %c0_11] : memref<2x1xf32, #tpu.memory_space<vmem>>, vector<2x1xf32>
    %15 = vector.broadcast %14 : vector<2x1xf32> to vector<2x256xf32>
    %16 = arith.addf %13, %15 : vector<2x256xf32>
    %17 = vector.extract_strided_slice %16 {offsets = [0, 0], sizes = [1, 256], strides = [1, 1]} : vector<2x256xf32> to vector<1x256xf32>
    %c0_12 = arith.constant 0 : index
    %c0_13 = arith.constant 0 : index
    %18 = vector.load %arg14[%c0_12, %c0_13] : memref<1x256xf32, #tpu.memory_space<vmem>>, vector<1x256xf32>
    tpu.vector_store %arg14[%c0_12, %c0_13], %17 {strides = array<i32>} : memref<1x256xf32, #tpu.memory_space<vmem>>, vector<1x256xf32>,
    %19 = vector.extract_strided_slice %16 {offsets = [1, 0], sizes = [1, 256], strides = [1, 1]} : vector<2x256xf32> to vector<1x256xf32>
    %c0_14 = arith.constant 0 : index
    %c0_15 = arith.constant 0 : index
    %20 = vector.load %arg4[%c0_14, %c0_15] : memref<1x256xf32, #tpu.memory_space<vmem>>, vector<1x256xf32>
    %21 = arith.addf %19, %20 : vector<1x256xf32>
    %cst_16 = arith.constant 0.000000e+00 : f32
    %22 = vector.broadcast %cst_16 : f32 to vector<1x256xf32>
    %23 = arith.subf %22, %21 : vector<1x256xf32>
    %24 = math.exp %23 : vector<1x256xf32>
    %cst_17 = arith.constant 1.000000e+00 : f32
    %25 = vector.broadcast %cst_17 : f32 to vector<1x256xf32>
    %26 = arith.addf %25, %24 : vector<1x256xf32>
    %27 = tpu.reciprocal %26 {approx = true} : vector<1x256xf32> -> vector<1x256xf32>
    %c0_18 = arith.constant 0 : index
    %c0_19 = arith.constant 0 : index
    %28 = vector.load %arg2[%c0_18, %c0_19] : memref<256x32xbf16, #tpu.memory_space<vmem>>, vector<256x32xbf16>
    %c0_20 = arith.constant 0 : index
    %c0_21 = arith.constant 0 : index
    %29 = vector.load %arg9[%c0_20, %c0_21] : memref<32x32xbf16, #tpu.memory_space<vmem>>, vector<32x32xbf16>
    %cst_22 = arith.constant dense<0.000000e+00> : vector<256x32xf32>
    %30 = tpu.matmul %28, %29, %cst_22 {dimension_numbers = #tpu.dot_dimension_numbers<[1], [0], [0], [1], [0, 0, 1, 1], [], []>} : vector<256x32xbf16>, vector<32x32xbf16>, vector<256x32xf32> -> vector<256x32xf32>
    %c0_23 = arith.constant 0 : index
    %c0_24 = arith.constant 0 : index
    %31 = vector.load %arg10[%c0_23, %c0_24] : memref<1x32xf32, #tpu.memory_space<vmem>>, vector<1x32xf32>
    %32 = vector.broadcast %31 : vector<1x32xf32> to vector<256x32xf32>
    %33 = arith.addf %30, %32 : vector<256x32xf32>
    %34 = arith.truncf %33 : vector<256x32xf32> to vector<256x32xbf16>
    %35 = tpu.iota {dimensions = array<i32: 0>} : vector<4x256xi32>
    %c0_25 = arith.constant 0 : index
    %c0_26 = arith.constant 0 : index
    %36 = vector.load %arg3[%c0_25, %c0_26] : memref<1x256xi32, #tpu.memory_space<vmem>>, vector<1x256xi32>
    %37 = vector.broadcast %36 : vector<1x256xi32> to vector<4x256xi32>
    %38 = arith.cmpi eq, %37, %35 : vector<4x256xi32>
    %39 = arith.extui %38 : vector<4x256xi1> to vector<4x256xi32>
    %40 = arith.sitofp %39 : vector<4x256xi32> to vector<4x256xf32>
    %41 = vector.broadcast %27 : vector<1x256xf32> to vector<4x256xf32>
    %42 = arith.mulf %40, %41 : vector<4x256xf32>
    %43 = arith.truncf %42 : vector<4x256xf32> to vector<4x256xbf16>
    %cst_27 = arith.constant dense<0.000000e+00> : vector<4x32xf32>
    %44 = tpu.matmul %43, %34, %cst_27 {dimension_numbers = #tpu.dot_dimension_numbers<[1], [0], [0], [1], [0, 0, 1, 1], [], []>} : vector<4x256xbf16>, vector<256x32xbf16>, vector<4x32xf32> -> vector<4x32xf32>
    %45 = arith.truncf %40 : vector<4x256xf32> to vector<4x256xbf16>
    %cst_28 = arith.constant dense<0.000000e+00> : vector<4x32xf32>
    %46 = tpu.matmul %45, %34, %cst_28 {dimension_numbers = #tpu.dot_dimension_numbers<[1], [0], [0], [1], [0, 0, 1, 1], [], []>} : vector<4x256xbf16>, vector<256x32xbf16>, vector<4x32xf32> -> vector<4x32xf32>
    %cst_29 = arith.constant dense<0.000000e+00> : vector<4xf32>
    %47 = vector.multi_reduction <add>, %42, %cst_29 [1] : vector<4x256xf32> to vector<4xf32>
    %48 = vector.shape_cast %47 : vector<4xf32> to vector<4x1xf32>
    %cst_30 = arith.constant dense<0.000000e+00> : vector<4xf32>
    %49 = vector.multi_reduction <add>, %40, %cst_30 [1] : vector<4x256xf32> to vector<4xf32>
    %50 = vector.shape_cast %49 : vector<4xf32> to vector<4x1xf32>
    %c0_31 = arith.constant 0 : index
    %c0_32 = arith.constant 0 : index
    %51 = vector.load %arg11[%c0_31, %c0_32] : memref<4x32xf32, #tpu.memory_space<vmem>>, vector<4x32xf32>
    %52 = arith.addf %51, %44 : vector<4x32xf32>
    %c0_33 = arith.constant 0 : index
    %c0_34 = arith.constant 0 : index
    %53 = vector.load %arg11[%c0_33, %c0_34] : memref<4x32xf32, #tpu.memory_space<vmem>>, vector<4x32xf32>
    tpu.vector_store %arg11[%c0_33, %c0_34], %52 {strides = array<i32>} : memref<4x32xf32, #tpu.memory_space<vmem>>, vector<4x32xf32>,
    %c0_35 = arith.constant 0 : index
    %c0_36 = arith.constant 0 : index
    %54 = vector.load %arg12[%c0_35, %c0_36] : memref<4x32xf32, #tpu.memory_space<vmem>>, vector<4x32xf32>
    %55 = arith.addf %54, %46 : vector<4x32xf32>
    %c0_37 = arith.constant 0 : index
    %c0_38 = arith.constant 0 : index
    %56 = vector.load %arg12[%c0_37, %c0_38] : memref<4x32xf32, #tpu.memory_space<vmem>>, vector<4x32xf32>
    tpu.vector_store %arg12[%c0_37, %c0_38], %55 {strides = array<i32>} : memref<4x32xf32, #tpu.memory_space<vmem>>, vector<4x32xf32>,
    %c0_39 = arith.constant 0 : index
    %c0_40 = arith.constant 0 : index
    %57 = vector.load %arg13[%c0_39, %c0_40] : memref<4x2xf32, #tpu.memory_space<vmem>>, vector<4x2xf32>
    %58 = tpu.concatenate %48, %50 in 1 : vector<4x1xf32>, vector<4x1xf32> -> vector<4x2xf32>
    %59 = arith.addf %57, %58 : vector<4x2xf32>
    %c0_41 = arith.constant 0 : index
    %c0_42 = arith.constant 0 : index
    %60 = vector.load %arg13[%c0_41, %c0_42] : memref<4x2xf32, #tpu.memory_space<vmem>>, vector<4x2xf32>
    tpu.vector_store %arg13[%c0_41, %c0_42], %59 {strides = array<i32>} : memref<4x2xf32, #tpu.memory_space<vmem>>, vector<4x2xf32>,
    %c0_i32_43 = arith.constant 0 : i32
    %61 = arith.cmpi eq, %arg0, %c0_i32_43 : i32
    %62 = arith.extui %61 : i1 to i32
    %c0_i32_44 = arith.constant 0 : i32
    %63 = arith.cmpi ne, %62, %c0_i32_44 : i32
    scf.if %63 {
      %c0_45 = arith.constant 0 : index
      %c0_46 = arith.constant 0 : index
      %64 = vector.load %arg11[%c0_45, %c0_46] : memref<4x32xf32, #tpu.memory_space<vmem>>, vector<4x32xf32>
      %c0_47 = arith.constant 0 : index
      %c0_48 = arith.constant 0 : index
      %65 = vector.load %arg12[%c0_47, %c0_48] : memref<4x32xf32, #tpu.memory_space<vmem>>, vector<4x32xf32>
      %c0_49 = arith.constant 0 : index
      %c1 = arith.constant 1 : index
      %66 = vector.load %arg13[%c0_49, %c1] : memref<4x2xf32, #tpu.memory_space<vmem>>, vector<4x1xf32>
      %cst_50 = arith.constant 1.000000e+00 : f32
      %67 = vector.broadcast %cst_50 : f32 to vector<4x1xf32>
      %68 = arith.maximumf %66, %67 : vector<4x1xf32>
      %69 = tpu.reciprocal %68 {approx = true} : vector<4x1xf32> -> vector<4x1xf32>
      %70 = vector.broadcast %69 : vector<4x1xf32> to vector<4x32xf32>
      %71 = arith.mulf %64, %70 : vector<4x32xf32>
      %c0_51 = arith.constant 0 : index
      %c0_52 = arith.constant 0 : index
      %72 = vector.load %arg11[%c0_51, %c0_52] : memref<4x32xf32, #tpu.memory_space<vmem>>, vector<4x32xf32>
      tpu.vector_store %arg11[%c0_51, %c0_52], %71 {strides = array<i32>} : memref<4x32xf32, #tpu.memory_space<vmem>>, vector<4x32xf32>,
      %73 = arith.subf %65, %64 : vector<4x32xf32>
      %74 = vector.broadcast %69 : vector<4x1xf32> to vector<4x32xf32>
      %75 = arith.mulf %73, %74 : vector<4x32xf32>
      %c0_53 = arith.constant 0 : index
      %c0_54 = arith.constant 0 : index
      %76 = vector.load %arg12[%c0_53, %c0_54] : memref<4x32xf32, #tpu.memory_space<vmem>>, vector<4x32xf32>
      tpu.vector_store %arg12[%c0_53, %c0_54], %75 {strides = array<i32>} : memref<4x32xf32, #tpu.memory_space<vmem>>, vector<4x32xf32>,
    } else {
    }
    return
  }
  func.func @transform_0(%arg0: i32) -> (i32, i32) {
    %c0_i32 = arith.constant 0 : i32
    %c0_i32_0 = arith.constant 0 : i32
    return %arg0, %c0_i32 : i32, i32
  }
  func.func @transform_1(%arg0: i32) -> (i32, i32) {
    %c0_i32 = arith.constant 0 : i32
    %c0_i32_0 = arith.constant 0 : i32
    return %arg0, %c0_i32 : i32, i32
  }
  func.func @transform_2(%arg0: i32) -> (i32, i32) {
    %c0_i32 = arith.constant 0 : i32
    %c0_i32_0 = arith.constant 0 : i32
    return %c0_i32, %arg0 : i32, i32
  }
  func.func @transform_3(%arg0: i32) -> (i32, i32) {
    %c0_i32 = arith.constant 0 : i32
    %c0_i32_0 = arith.constant 0 : i32
    return %c0_i32, %arg0 : i32, i32
  }
  func.func @transform_4(%arg0: i32) -> (i32, i32) {
    %c0_i32 = arith.constant 0 : i32
    %c0_i32_0 = arith.constant 0 : i32
    %c0_i32_1 = arith.constant 0 : i32
    return %c0_i32, %c0_i32_0 : i32, i32
  }
  func.func @transform_5(%arg0: i32) -> (i32, i32) {
    %c0_i32 = arith.constant 0 : i32
    %c0_i32_0 = arith.constant 0 : i32
    %c0_i32_1 = arith.constant 0 : i32
    return %c0_i32, %c0_i32_0 : i32, i32
  }
  func.func @transform_6(%arg0: i32) -> (i32, i32) {
    %c0_i32 = arith.constant 0 : i32
    %c0_i32_0 = arith.constant 0 : i32
    %c0_i32_1 = arith.constant 0 : i32
    return %c0_i32, %c0_i32_0 : i32, i32
  }
  func.func @transform_7(%arg0: i32) -> (i32, i32) {
    %c0_i32 = arith.constant 0 : i32
    %c0_i32_0 = arith.constant 0 : i32
    %c0_i32_1 = arith.constant 0 : i32
    return %c0_i32, %c0_i32_0 : i32, i32
  }
  func.func @transform_8(%arg0: i32) -> (i32, i32) {
    %c0_i32 = arith.constant 0 : i32
    %c0_i32_0 = arith.constant 0 : i32
    %c0_i32_1 = arith.constant 0 : i32
    return %c0_i32, %c0_i32_0 : i32, i32
  }
  func.func @transform_9(%arg0: i32) -> (i32, i32) {
    %c0_i32 = arith.constant 0 : i32
    %c0_i32_0 = arith.constant 0 : i32
    %c0_i32_1 = arith.constant 0 : i32
    return %c0_i32, %c0_i32_0 : i32, i32
  }
  func.func @transform_10(%arg0: i32) -> (i32, i32) {
    %c0_i32 = arith.constant 0 : i32
    %c0_i32_0 = arith.constant 0 : i32
    %c0_i32_1 = arith.constant 0 : i32
    return %c0_i32, %c0_i32_0 : i32, i32
  }
  func.func @transform_11(%arg0: i32) -> (i32, i32) {
    %c0_i32 = arith.constant 0 : i32
    %c0_i32_0 = arith.constant 0 : i32
    %c0_i32_1 = arith.constant 0 : i32
    return %c0_i32, %c0_i32_0 : i32, i32
  }
  func.func @transform_12(%arg0: i32) -> (i32, i32) {
    %c0_i32 = arith.constant 0 : i32
    %c0_i32_0 = arith.constant 0 : i32
    %c0_i32_1 = arith.constant 0 : i32
    return %c0_i32, %c0_i32_0 : i32, i32
  }
  func.func @transform_13(%arg0: i32) -> (i32, i32) {
    %c0_i32 = arith.constant 0 : i32
    %c0_i32_0 = arith.constant 0 : i32
    return %c0_i32, %arg0 : i32, i32
  }
}

</mosaic_0001>

<llo_original>
// kernel: tpu_custom_call.1
$region0: #{tpu_custom_call.1}
  #allocation0 [shape = 'u32[]', space=smem, size = 0x4, offset = 0x4, fixed_abs, tag = 'smem constant byte address 0x4 - core index']
  #allocation1 [shape = 'u32[144,128]{1,0:T(1,128)}', space=vmem, size = 0x12000, scoped, tag = 'internal scratch']
  %s0 = inlined_call_operand.vmem [shape: bf16[256,16], index: 0, kind: input, shape index: {}]
  %s1 = inlined_call_operand.vmem [shape: bf16[256,32], index: 1, kind: input, shape index: {}]
  %s2 = inlined_call_operand.vmem [shape: s32[1,256], index: 2, kind: input, shape index: {}]
  %s3 = inlined_call_operand.vmem [shape: f32[1,256], index: 3, kind: input, shape index: {}]
  %s4 = inlined_call_operand.vmem [shape: bf16[16,32], index: 4, kind: input, shape index: {}]
  %s5 = inlined_call_operand.vmem [shape: f32[1,32], index: 5, kind: input, shape index: {}]
  %s6 = inlined_call_operand.vmem [shape: bf16[2,32], index: 6, kind: input, shape index: {}]
  %s7 = inlined_call_operand.vmem [shape: f32[2,1], index: 7, kind: input, shape index: {}]
  %s8 = inlined_call_operand.vmem [shape: bf16[32,32], index: 8, kind: input, shape index: {}]
  %s9 = inlined_call_operand.vmem [shape: f32[1,32], index: 9, kind: input, shape index: {}]
  %s10 = inlined_call_operand.hbm [shape: f32[4,32], index: 10, kind: output, shape index: {0}]
  %s11 = inlined_call_operand.hbm [shape: f32[4,32], index: 11, kind: output, shape index: {1}]
  %s12 = inlined_call_operand.vmem [shape: f32[4,2], index: 12, kind: output, shape index: {2}]
  %s13 = inlined_call_operand.hbm [shape: f32[1,256], index: 13, kind: output, shape index: {3}]
  %14 = xla_tuple %s10, %s11, %s12, %s13
  %s15 = sld [smem:[#allocation0]]
  $region82: #{tpu_custom_call.1} parent=0
    _
  %s17 = ssub.s32 1, %s15
  %s18 = scalar_select 0, %s17, %s15
  $region1: #{tpu_custom_call.1} parent=0
    #allocation2 [shape = 'u8[2048]{0}', space=vmem, size = 0x800, scoped, tag = 'output window, operand 0, single buffered']
    #allocation3 [shape = 's32[1]{0}', space=sflag, size = 0x4, scoped, tag = 'scoped memory for tpu_custom_call.1']
    #allocation4 [shape = 'u8[2048]{0}', space=vmem, size = 0x800, scoped, tag = 'output window, operand 1, single buffered']
    #allocation5 [shape = 's32[1]{0}', space=sflag, size = 0x4, scoped, tag = 'scoped memory for tpu_custom_call.1']
    #allocation6 [shape = 'u8[1024]{0}', space=vmem, size = 0x400, scoped, tag = 'output window, operand 3, single buffered']
    %19 = vsyncpa [#allocation3], 0
    %20 = vsyncpa [#allocation5], 0
    // Predicated region
    $region2: #{tpu_custom_call.1} parent=1 // pred_check
      _
    $region3: #{tpu_custom_call.1} parent=1 // pred_check_branch
      %22 = sbr.rel (0) target = $region5
    $region4: #{tpu_custom_call.1} parent=1 // pred_region
      _
    $region5: #{tpu_custom_call.1} parent=1 // pred_fallthru
      _
    // Predicated region
    $region6: #{tpu_custom_call.1} parent=1 // pred_check
      _
    $region7: #{tpu_custom_call.1} parent=1 // pred_check_branch
      %24 = sbr.rel (0) target = $region9
    $region8: #{tpu_custom_call.1} parent=1 // pred_region
      _
    $region9: #{tpu_custom_call.1} parent=1 // pred_fallthru
      _
    // Predicated region
    $region10: #{tpu_custom_call.1} parent=1 // pred_check
      _
    $region11: #{tpu_custom_call.1} parent=1 // pred_check_branch
      %26 = sbr.rel (0) target = $region13
    $region12: #{tpu_custom_call.1} parent=1 // pred_region
      _
    $region13: #{tpu_custom_call.1} parent=1 // pred_fallthru
      _
    // Predicated region
    $region14: #{tpu_custom_call.1} parent=1 // pred_check
      _
    $region15: #{tpu_custom_call.1} parent=1 // pred_check_branch
      %28 = sbr.rel (0) target = $region17
    $region16: #{tpu_custom_call.1} parent=1 // pred_region
      _
    $region17: #{tpu_custom_call.1} parent=1 // pred_fallthru
      _
    // Predicated region
    $region18: #{tpu_custom_call.1} parent=1 // pred_check
      _
    $region19: #{tpu_custom_call.1} parent=1 // pred_check_branch
      %30 = sbr.rel (0) target = $region21
    $region20: #{tpu_custom_call.1} parent=1 // pred_region
      _
    $region21: #{tpu_custom_call.1} parent=1 // pred_fallthru
      _
    // Predicated region
    $region22: #{tpu_custom_call.1} parent=1 // pred_check
      _
    $region23: #{tpu_custom_call.1} parent=1 // pred_check_branch
      %32 = sbr.rel (0) target = $region25
    $region24: #{tpu_custom_call.1} parent=1 // pred_region
      _
    $region25: #{tpu_custom_call.1} parent=1 // pred_fallthru
      _
    // Predicated region
    $region26: #{tpu_custom_call.1} parent=1 // pred_check
      _
    $region27: #{tpu_custom_call.1} parent=1 // pred_check_branch
      %34 = sbr.rel (0) target = $region29
    $region28: #{tpu_custom_call.1} parent=1 // pred_region
      _
    $region29: #{tpu_custom_call.1} parent=1 // pred_fallthru
      _
    // Predicated region
    $region30: #{tpu_custom_call.1} parent=1 // pred_check
      _
    $region31: #{tpu_custom_call.1} parent=1 // pred_check_branch
      %36 = sbr.rel (0) target = $region33
    $region32: #{tpu_custom_call.1} parent=1 // pred_region
      _
    $region33: #{tpu_custom_call.1} parent=1 // pred_fallthru
      _
    // Predicated region
    $region34: #{tpu_custom_call.1} parent=1 // pred_check
      _
    $region35: #{tpu_custom_call.1} parent=1 // pred_check_branch
      %38 = sbr.rel (0) target = $region37
    $region36: #{tpu_custom_call.1} parent=1 // pred_region
      _
    $region37: #{tpu_custom_call.1} parent=1 // pred_fallthru
      _
    // Predicated region
    $region38: #{tpu_custom_call.1} parent=1 // pred_check
      _
    $region39: #{tpu_custom_call.1} parent=1 // pred_check_branch
      %40 = sbr.rel (0) target = $region41
    $region40: #{tpu_custom_call.1} parent=1 // pred_region
      _
    $region41: #{tpu_custom_call.1} parent=1 // pred_fallthru
      _
    %p42 = scmp.eq.s32.totalorder 0, 0
    // Predicated region
    $region42: #{tpu_custom_call.1} parent=1 // pred_check
      %p43 = pneg %p42
    $region43: #{tpu_custom_call.1} parent=1 // pred_check_branch
      %45 = sbr.rel (%p43) target = $region45
    $region44: #{tpu_custom_call.1} parent=1 // pred_region
      %vm46 = vcmask 257024
      %47 = vst.msk [vmem:[#allocation2] sm:$0xf] %vm46, 0.0
      %48 = vst.msk [vmem:[#allocation4] sm:$0xf] %vm46, 0.0
      %vm49 = vcmask 11264
      %50 = vst.msk [vmem:[%s12] sm:$0xf] %vm49, 0.0
    $region45: #{tpu_custom_call.1} parent=1 // pred_fallthru
      _
    %v51 = vld [vmem:[%s0] sm:$0xf]
    %v52 = vld [vmem:[%s0 + $0x4] sm:$0xf]
    %v53 = vld [vmem:[%s0 + $0x8] sm:$0xf]
    %v54 = vld [vmem:[%s0 + $0xc] sm:$0xf]
    %v55 = vld [vmem:[%s0 + $0x10] sm:$0xf]
    %v56 = vld [vmem:[%s0 + $0x14] sm:$0xf]
    %v57 = vld [vmem:[%s0 + $0x18] sm:$0xf]
    %v58 = vld [vmem:[%s0 + $0x1c] sm:$0xf]
    %v59 = vld [vmem:[%s0 + $0x20] sm:$0xf]
    %v60 = vld [vmem:[%s0 + $0x24] sm:$0xf]
    %v61 = vld [vmem:[%s0 + $0x28] sm:$0xf]
    %v62 = vld [vmem:[%s0 + $0x2c] sm:$0xf]
    %v63 = vld [vmem:[%s0 + $0x30] sm:$0xf]
    %v64 = vld [vmem:[%s0 + $0x34] sm:$0xf]
    %v65 = vld [vmem:[%s0 + $0x38] sm:$0xf]
    %v66 = vld [vmem:[%s0 + $0x3c] sm:$0xf]
    %v67 = vld [vmem:[%s0 + $0x40] sm:$0xf]
    %v68 = vld [vmem:[%s0 + $0x44] sm:$0xf]
    %v69 = vld [vmem:[%s0 + $0x48] sm:$0xf]
    %v70 = vld [vmem:[%s0 + $0x4c] sm:$0xf]
    %v71 = vld [vmem:[%s0 + $0x50] sm:$0xf]
    %v72 = vld [vmem:[%s0 + $0x54] sm:$0xf]
    %v73 = vld [vmem:[%s0 + $0x58] sm:$0xf]
    %v74 = vld [vmem:[%s0 + $0x5c] sm:$0xf]
    %v75 = vld [vmem:[%s0 + $0x60] sm:$0xf]
    %v76 = vld [vmem:[%s0 + $0x64] sm:$0xf]
    %v77 = vld [vmem:[%s0 + $0x68] sm:$0xf]
    %v78 = vld [vmem:[%s0 + $0x6c] sm:$0xf]
    %v79 = vld [vmem:[%s0 + $0x70] sm:$0xf]
    %v80 = vld [vmem:[%s0 + $0x74] sm:$0xf]
    %v81 = vld [vmem:[%s0 + $0x78] sm:$0xf]
    %v82 = vld [vmem:[%s0 + $0x7c] sm:$0xf]
    %v83 = vld [vmem:[%s4] sm:$0xf]
    %v84 = vld [vmem:[%s4 + $0x4] sm:$0xf]
    %v85 = vld [vmem:[%s5] sm:$0x1]
    %v87 = vlaneseq
    %v88 = vshrl.u32 %v87, 7
    %v89 = vsub.s32 0, %v88
    %v90 = vrot.slane %v85, %v89
    %v124 = vunpack.c.l.b16 %v51
    %v125 = vunpack.c.l.b16 %v52
    %v126 = vunpack.c.l.b16 %v53
    %v127 = vunpack.c.l.b16 %v54
    %v128 = vunpack.c.l.b16 %v55
    %v129 = vunpack.c.l.b16 %v56
    %v130 = vunpack.c.l.b16 %v57
    %v131 = vunpack.c.l.b16 %v58
    %v132 = vunpack.c.l.b16 %v59
    %v133 = vunpack.c.l.b16 %v60
    %v134 = vunpack.c.l.b16 %v61
    %v135 = vunpack.c.l.b16 %v62
    %v136 = vunpack.c.l.b16 %v63
    %v137 = vunpack.c.l.b16 %v64
    %v138 = vunpack.c.l.b16 %v65
    %v139 = vunpack.c.l.b16 %v66
    %v140 = vunpack.c.l.b16 %v67
    %v141 = vunpack.c.l.b16 %v68
    %v142 = vunpack.c.l.b16 %v69
    %v143 = vunpack.c.l.b16 %v70
    %v144 = vunpack.c.l.b16 %v71
    %v145 = vunpack.c.l.b16 %v72
    %v146 = vunpack.c.l.b16 %v73
    %v147 = vunpack.c.l.b16 %v74
    %v148 = vunpack.c.l.b16 %v75
    %v149 = vunpack.c.l.b16 %v76
    %v150 = vunpack.c.l.b16 %v77
    %v151 = vunpack.c.l.b16 %v78
    %v152 = vunpack.c.l.b16 %v79
    %v153 = vunpack.c.l.b16 %v80
    %v154 = vunpack.c.l.b16 %v81
    %v155 = vunpack.c.l.b16 %v82
    %v156 = vpack.c.b16 %v125, %v124
    %v157 = vpack.c.b16 %v127, %v126
    %v158 = vpack.c.b16 %v129, %v128
    %v159 = vpack.c.b16 %v131, %v130
    %v160 = vpack.c.b16 %v133, %v132
    %v161 = vpack.c.b16 %v135, %v134
    %v162 = vpack.c.b16 %v137, %v136
    %v163 = vpack.c.b16 %v139, %v138
    %v164 = vpack.c.b16 %v141, %v140
    %v165 = vpack.c.b16 %v143, %v142
    %v166 = vpack.c.b16 %v145, %v144
    %v167 = vpack.c.b16 %v147, %v146
    %v168 = vpack.c.b16 %v149, %v148
    %v169 = vpack.c.b16 %v151, %v150
    %v170 = vpack.c.b16 %v153, %v152
    %v171 = vpack.c.b16 %v155, %v154
    %v174 = vunpack.c.l.b16 %v83
    %v175 = vunpack.c.l.b16 %v84
    %v176 = vpack.c.b16 %v175, %v174
    %vm178 = vcmask 130048
    %v180 = vsel %vm178, %v156, 0
    %v183 = vsel %vm178, %v157, 0
    %v186 = vsel %vm178, %v158, 0
    %v189 = vsel %vm178, %v159, 0
    %v192 = vsel %vm178, %v160, 0
    %v195 = vsel %vm178, %v161, 0
    %v198 = vsel %vm178, %v162, 0
    %v201 = vsel %vm178, %v163, 0
    %v204 = vsel %vm178, %v164, 0
    %v207 = vsel %vm178, %v165, 0
    %v210 = vsel %vm178, %v166, 0
    %v213 = vsel %vm178, %v167, 0
    %v216 = vsel %vm178, %v168, 0
    %v219 = vsel %vm178, %v169, 0
    %v222 = vsel %vm178, %v170, 0
    %v225 = vsel %vm178, %v171, 0
    %227 = vmatprep.subr.bf16.mxu0 0
    %228 = vmatpush1.bf16.msra.mxu0 %v176
    %229 = vmatprep.subr.bf16.mxu0 0
    %230 = vmatpush1.bf16.msra.mxu0 0
    %231 = vmatprep.subr.bf16.mxu0 0
    %232 = vmatpush1.bf16.msra.mxu0 0
    %233 = vmatprep.subr.bf16.mxu0 0
    %234 = vmatpush1.bf16.msra.mxu0 0
    %235 = vmatprep.subr.bf16.mxu0 0
    %236 = vmatpush1.bf16.msra.mxu0 0
    %237 = vmatprep.subr.bf16.mxu0 0
    %238 = vmatpush1.bf16.msra.mxu0 0
    %239 = vmatprep.subr.bf16.mxu0 0
    %240 = vmatpush1.bf16.msra.mxu0 0
    %241 = vmatprep.subr.bf16.mxu0 0
    %242 = vmatpush1.bf16.msra.mxu0 0
    %243 = vmatprep.subr.bf16.mxu0 0
    %244 = vmatpush1.bf16.msra.mxu0 0
    %245 = vmatprep.subr.bf16.mxu0 0
    %246 = vmatpush1.bf16.msra.mxu0 0
    %247 = vmatprep.subr.bf16.mxu0 0
    %248 = vmatpush1.bf16.msra.mxu0 0
    %249 = vmatprep.subr.bf16.mxu0 0
    %250 = vmatpush1.bf16.msra.mxu0 0
    %251 = vmatprep.subr.bf16.mxu0 0
    %252 = vmatpush1.bf16.msra.mxu0 0
    %253 = vmatprep.subr.bf16.mxu0 0
    %254 = vmatpush1.bf16.msra.mxu0 0
    %255 = vmatprep.subr.bf16.mxu0 0
    %256 = vmatpush1.bf16.msra.mxu0 0
    %257 = vmatprep.subr.bf16.mxu0 0
    %258 = vmatpush1.bf16.msra.mxu0 0
    %259 = vmatprep.mubr.bf16.mxu0 0
    %260 = vmatmul.mubr.bf16.gmra.mrb[0].mxu0 %v180
    %v261 = vpop.f32.mrb[0].mxu0
    %v262 = vadd.f32 %v90, %v261
    %v263 = vpop.f32.mrb[0].mxu0
    %v264 = vpop.f32.mrb[0].mxu0
    %v265 = vadd.f32 %v90, %v264
    %v266 = vpop.f32.mrb[0].mxu0
    %267 = vmatprep.mubr.bf16.mxu0 0
    %268 = vmatmul.mubr.bf16.gmra.mrb[0].mxu0 %v183
    %v269 = vpop.f32.mrb[0].mxu0
    %v270 = vadd.f32 %v90, %v269
    %v271 = vpop.f32.mrb[0].mxu0
    %v272 = vpop.f32.mrb[0].mxu0
    %v273 = vadd.f32 %v90, %v272
    %v274 = vpop.f32.mrb[0].mxu0
    %275 = vmatprep.mubr.bf16.mxu0 0
    %276 = vmatmul.mubr.bf16.gmra.mrb[0].mxu0 %v186
    %v277 = vpop.f32.mrb[0].mxu0
    %v278 = vadd.f32 %v90, %v277
    %v279 = vpop.f32.mrb[0].mxu0
    %v280 = vpop.f32.mrb[0].mxu0
    %v281 = vadd.f32 %v90, %v280
    %v282 = vpop.f32.mrb[0].mxu0
    %283 = vmatprep.mubr.bf16.mxu0 0
    %284 = vmatmul.mubr.bf16.gmra.mrb[0].mxu0 %v189
    %v285 = vpop.f32.mrb[0].mxu0
    %v286 = vadd.f32 %v90, %v285
    %v287 = vpop.f32.mrb[0].mxu0
    %v288 = vpop.f32.mrb[0].mxu0
    %v289 = vadd.f32 %v90, %v288
    %v290 = vpop.f32.mrb[0].mxu0
    %291 = vmatprep.mubr.bf16.mxu0 0
    %292 = vmatmul.mubr.bf16.gmra.mrb[0].mxu0 %v192
    %v293 = vpop.f32.mrb[0].mxu0
    %v294 = vadd.f32 %v90, %v293
    %v295 = vpop.f32.mrb[0].mxu0
    %v296 = vpop.f32.mrb[0].mxu0
    %v297 = vadd.f32 %v90, %v296
    %v298 = vpop.f32.mrb[0].mxu0
    %299 = vmatprep.mubr.bf16.mxu0 0
    %300 = vmatmul.mubr.bf16.gmra.mrb[0].mxu0 %v195
    %v301 = vpop.f32.mrb[0].mxu0
    %v302 = vadd.f32 %v90, %v301
    %v303 = vpop.f32.mrb[0].mxu0
    %v304 = vpop.f32.mrb[0].mxu0
    %v305 = vadd.f32 %v90, %v304
    %v306 = vpop.f32.mrb[0].mxu0
    %307 = vmatprep.mubr.bf16.mxu0 0
    %308 = vmatmul.mubr.bf16.gmra.mrb[0].mxu0 %v198
    %v309 = vpop.f32.mrb[0].mxu0
    %v310 = vadd.f32 %v90, %v309
    %v311 = vpop.f32.mrb[0].mxu0
    %v312 = vpop.f32.mrb[0].mxu0
    %v313 = vadd.f32 %v90, %v312
    %v314 = vpop.f32.mrb[0].mxu0
    %315 = vmatprep.mubr.bf16.mxu0 0
    %316 = vmatmul.mubr.bf16.gmra.mrb[0].mxu0 %v201
    %v317 = vpop.f32.mrb[0].mxu0
    %v318 = vadd.f32 %v90, %v317
    %v319 = vpop.f32.mrb[0].mxu0
    %v320 = vpop.f32.mrb[0].mxu0
    %v321 = vadd.f32 %v90, %v320
    %v322 = vpop.f32.mrb[0].mxu0
    %323 = vmatprep.mubr.bf16.mxu0 0
    %324 = vmatmul.mubr.bf16.gmra.mrb[0].mxu0 %v204
    %v325 = vpop.f32.mrb[0].mxu0
    %v326 = vadd.f32 %v90, %v325
    %v327 = vpop.f32.mrb[0].mxu0
    %v328 = vpop.f32.mrb[0].mxu0
    %v329 = vadd.f32 %v90, %v328
    %v330 = vpop.f32.mrb[0].mxu0
    %331 = vmatprep.mubr.bf16.mxu0 0
    %332 = vmatmul.mubr.bf16.gmra.mrb[0].mxu0 %v207
    %v333 = vpop.f32.mrb[0].mxu0
    %v334 = vadd.f32 %v90, %v333
    %v335 = vpop.f32.mrb[0].mxu0
    %v336 = vpop.f32.mrb[0].mxu0
    %v337 = vadd.f32 %v90, %v336
    %v338 = vpop.f32.mrb[0].mxu0
    %339 = vmatprep.mubr.bf16.mxu0 0
    %340 = vmatmul.mubr.bf16.gmra.mrb[0].mxu0 %v210
    %v341 = vpop.f32.mrb[0].mxu0
    %v342 = vadd.f32 %v90, %v341
    %v343 = vpop.f32.mrb[0].mxu0
    %v344 = vpop.f32.mrb[0].mxu0
    %v345 = vadd.f32 %v90, %v344
    %v346 = vpop.f32.mrb[0].mxu0
    %347 = vmatprep.mubr.bf16.mxu0 0
    %348 = vmatmul.mubr.bf16.gmra.mrb[0].mxu0 %v213
    %v349 = vpop.f32.mrb[0].mxu0
    %v350 = vadd.f32 %v90, %v349
    %v351 = vpop.f32.mrb[0].mxu0
    %v352 = vpop.f32.mrb[0].mxu0
    %v353 = vadd.f32 %v90, %v352
    %v354 = vpop.f32.mrb[0].mxu0
    %355 = vmatprep.mubr.bf16.mxu0 0
    %356 = vmatmul.mubr.bf16.gmra.mrb[0].mxu0 %v216
    %v357 = vpop.f32.mrb[0].mxu0
    %v358 = vadd.f32 %v90, %v357
    %v359 = vpop.f32.mrb[0].mxu0
    %v360 = vpop.f32.mrb[0].mxu0
    %v361 = vadd.f32 %v90, %v360
    %v362 = vpop.f32.mrb[0].mxu0
    %363 = vmatprep.mubr.bf16.mxu0 0
    %364 = vmatmul.mubr.bf16.gmra.mrb[0].mxu0 %v219
    %v365 = vpop.f32.mrb[0].mxu0
    %v366 = vadd.f32 %v90, %v365
    %v367 = vpop.f32.mrb[0].mxu0
    %v368 = vpop.f32.mrb[0].mxu0
    %v369 = vadd.f32 %v90, %v368
    %v370 = vpop.f32.mrb[0].mxu0
    %371 = vmatprep.mubr.bf16.mxu0 0
    %372 = vmatmul.mubr.bf16.gmra.mrb[0].mxu0 %v222
    %v373 = vpop.f32.mrb[0].mxu0
    %v374 = vadd.f32 %v90, %v373
    %v375 = vpop.f32.mrb[0].mxu0
    %v376 = vpop.f32.mrb[0].mxu0
    %v377 = vadd.f32 %v90, %v376
    %v378 = vpop.f32.mrb[0].mxu0
    %379 = vmatprep.mubr.bf16.mxu0 0
    %380 = vmatmul.mubr.bf16.gmra.mrb[0].mxu0 %v225
    %v381 = vpop.f32.mrb[0].mxu0
    %v382 = vadd.f32 %v90, %v381
    %v383 = vpop.f32.mrb[0].mxu0
    %v384 = vpop.f32.mrb[0].mxu0
    %v385 = vadd.f32 %v90, %v384
    %v386 = vpop.f32.mrb[0].mxu0
    %387 = vdwg.mxu0
    %v388 = vmax.f32 %v262, 0.0
    %v389 = vmax.f32 %v265, 0.0
    %v390 = vmax.f32 %v270, 0.0
    %v391 = vmax.f32 %v273, 0.0
    %v392 = vmax.f32 %v278, 0.0
    %v393 = vmax.f32 %v281, 0.0
    %v394 = vmax.f32 %v286, 0.0
    %v395 = vmax.f32 %v289, 0.0
    %v396 = vmax.f32 %v294, 0.0
    %v397 = vmax.f32 %v297, 0.0
    %v398 = vmax.f32 %v302, 0.0
    %v399 = vmax.f32 %v305, 0.0
    %v400 = vmax.f32 %v310, 0.0
    %v401 = vmax.f32 %v313, 0.0
    %v402 = vmax.f32 %v318, 0.0
    %v403 = vmax.f32 %v321, 0.0
    %v404 = vmax.f32 %v326, 0.0
    %v405 = vmax.f32 %v329, 0.0
    %v406 = vmax.f32 %v334, 0.0
    %v407 = vmax.f32 %v337, 0.0
    %v408 = vmax.f32 %v342, 0.0
    %v409 = vmax.f32 %v345, 0.0
    %v410 = vmax.f32 %v350, 0.0
    %v411 = vmax.f32 %v353, 0.0
    %v412 = vmax.f32 %v358, 0.0
    %v413 = vmax.f32 %v361, 0.0
    %v414 = vmax.f32 %v366, 0.0
    %v415 = vmax.f32 %v369, 0.0
    %v416 = vmax.f32 %v374, 0.0
    %v417 = vmax.f32 %v377, 0.0
    %v418 = vmax.f32 %v382, 0.0
    %v419 = vmax.f32 %v385, 0.0
    %v420 = vpack.c.bf16 %v389, %v388
    %v421 = vpack.c.bf16 %v391, %v390
    %v422 = vpack.c.bf16 %v393, %v392
    %v423 = vpack.c.bf16 %v395, %v394
    %v424 = vpack.c.bf16 %v397, %v396
    %v425 = vpack.c.bf16 %v399, %v398
    %v426 = vpack.c.bf16 %v401, %v400
    %v427 = vpack.c.bf16 %v403, %v402
    %v428 = vpack.c.bf16 %v405, %v404
    %v429 = vpack.c.bf16 %v407, %v406
    %v430 = vpack.c.bf16 %v409, %v408
    %v431 = vpack.c.bf16 %v411, %v410
    %v432 = vpack.c.bf16 %v413, %v412
    %v433 = vpack.c.bf16 %v415, %v414
    %v434 = vpack.c.bf16 %v417, %v416
    %v435 = vpack.c.bf16 %v419, %v418
    %v436 = vld [vmem:[%s6] sm:$0x1]
    %v437 = vld [vmem:[%s7] sm:$0x3]
    %439 = vset.pattern.permute.xlu0 0
    %440 = vperm.xlu0 %439, %v437
    %v441 = vpop.permute.xlu0 %440
    %vm443 = vcmask 261120
    %v445 = vsel %vm443, %v436, 0
    %v448 = vsel %vm443, %v420, 0
    %v451 = vsel %vm443, %v421, 0
    %v454 = vsel %vm443, %v422, 0
    %v457 = vsel %vm443, %v423, 0
    %v460 = vsel %vm443, %v424, 0
    %v463 = vsel %vm443, %v425, 0
    %v466 = vsel %vm443, %v426, 0
    %v469 = vsel %vm443, %v427, 0
    %v472 = vsel %vm443, %v428, 0
    %v475 = vsel %vm443, %v429, 0
    %v478 = vsel %vm443, %v430, 0
    %v481 = vsel %vm443, %v431, 0
    %v484 = vsel %vm443, %v432, 0
    %v487 = vsel %vm443, %v433, 0
    %v490 = vsel %vm443, %v434, 0
    %v493 = vsel %vm443, %v435, 0
    %495 = vmatprep.subr.bf16.mxu0 0
    %496 = vmatpush1.bf16.xpose.msra.mxu0 %v448
    %497 = vmatprep.subr.bf16.mxu0 0
    %498 = vmatpush1.bf16.xpose.msra.mxu0 %v451
    %499 = vmatprep.subr.bf16.mxu0 0
    %500 = vmatpush1.bf16.xpose.msra.mxu0 %v454
    %501 = vmatprep.subr.bf16.mxu0 0
    %502 = vmatpush1.bf16.xpose.msra.mxu0 %v457
    %503 = vmatprep.subr.bf16.mxu0 0
    %504 = vmatpush1.bf16.xpose.msra.mxu0 %v460
    %505 = vmatprep.subr.bf16.mxu0 0
    %506 = vmatpush1.bf16.xpose.msra.mxu0 %v463
    %507 = vmatprep.subr.bf16.mxu0 0
    %508 = vmatpush1.bf16.xpose.msra.mxu0 %v466
    %509 = vmatprep.subr.bf16.mxu0 0
    %510 = vmatpush1.bf16.xpose.msra.mxu0 %v469
    %511 = vmatprep.subr.bf16.mxu0 0
    %512 = vmatpush1.bf16.xpose.msra.mxu0 %v472
    %513 = vmatprep.subr.bf16.mxu0 0
    %514 = vmatpush1.bf16.xpose.msra.mxu0 %v475
    %515 = vmatprep.subr.bf16.mxu0 0
    %516 = vmatpush1.bf16.xpose.msra.mxu0 %v478
    %517 = vmatprep.subr.bf16.mxu0 0
    %518 = vmatpush1.bf16.xpose.msra.mxu0 %v481
    %519 = vmatprep.subr.bf16.mxu0 0
    %520 = vmatpush1.bf16.xpose.msra.mxu0 %v484
    %521 = vmatprep.subr.bf16.mxu0 0
    %522 = vmatpush1.bf16.xpose.msra.mxu0 %v487
    %523 = vmatprep.subr.bf16.mxu0 0
    %524 = vmatpush1.bf16.xpose.msra.mxu0 %v490
    %525 = vmatprep.subr.bf16.mxu0 0
    %526 = vmatpush1.bf16.xpose.msra.mxu0 %v493
    %527 = vmatprep.mubr.bf16.mxu0 0
    %528 = vmatmul.mubr.bf16.gmra.mrb[0].mxu0 %v445
    %v529 = vpop.f32.mrb[0].mxu0
    %v530 = vadd.f32 %v441, %v529
    %v531 = vpop.f32.mrb[0].mxu0
    %v532 = vadd.f32 %v441, %v531
    %v533 = vpop.f32.mrb[0].mxu0
    %v534 = vpop.f32.mrb[0].mxu0
    %535 = vdwg.mxu0
    %v538 = vcombine.low %v530, %v532
    %v540 = vunpack.c.l.s4 1966171168
    %v541 = vunpack.c.0.s8 %v540
    %v542 = vlaneseq
    %v543 = vshrl.u32 %v542, 7
    %v544 = vsub.s32 %v541, %v543
    %v545 = vrot.slane %v538, %v544
    %v547 = vunpack.c.l.s4 1966171168
    %v548 = vunpack.c.0.s8 %v547
    %v549 = vlaneseq
    %v550 = vshrl.u32 %v549, 7
    %v551 = vsub.s32 %v548, %v550
    %v552 = vrot.slane %v545, %v551
    %v554 = vlaneseq
    %vm555 = vcmp.ge.s32.totalorder %v554, 0
    %vm556 = vcmp.lt.s32.totalorder %v554, 256
    %vm557 = vmand %vm555, %vm556
    %558 = vst.msk [vmem:[#allocation6] sm:$0x3] %vm557, %v552
    %v559 = vld [vmem:[%s3] sm:$0x3]
    %v561 = vlaneseq
    %v562 = vshrl.u32 %v561, 7
    %v563 = vsub.s32 0, %v562
    %v564 = vrot.slane %v559, %v563
    %v565 = vlaneseq
    %v566 = vshrl.u32 %v565, 7
    %v567 = vsub.s32 1, %v566
    %v568 = vrot.slane %v559, %v567
    %v571 = vadd.f32 %v530, %v564
    %v572 = vadd.f32 %v532, %v568
    %v573 = vsub.f32 0.0, %v571
    %v574 = vsub.f32 0.0, %v572
    %v575 = vmul.f32 %v573, 1.442695
    %v576 = vpow.pop %v575
    %v577 = vmul.f32 %v574, 1.442695
    %v578 = vpow.pop %v577
    %v579 = vadd.f32 %v576, 1.0
    %v580 = vadd.f32 %v578, 1.0
    %v581 = vrcp.pop %v579
    %v582 = vrcp.pop %v580
    %v583 = vld [vmem:[%s1] sm:$0xf]
    %v584 = vld [vmem:[%s1 + $0x4] sm:$0xf]
    %v585 = vld [vmem:[%s1 + $0x8] sm:$0xf]
    %v586 = vld [vmem:[%s1 + $0xc] sm:$0xf]
    %v587 = vld [vmem:[%s1 + $0x10] sm:$0xf]
    %v588 = vld [vmem:[%s1 + $0x14] sm:$0xf]
    %v589 = vld [vmem:[%s1 + $0x18] sm:$0xf]
    %v590 = vld [vmem:[%s1 + $0x1c] sm:$0xf]
    %v591 = vld [vmem:[%s1 + $0x20] sm:$0xf]
    %v592 = vld [vmem:[%s1 + $0x24] sm:$0xf]
    %v593 = vld [vmem:[%s1 + $0x28] sm:$0xf]
    %v594 = vld [vmem:[%s1 + $0x2c] sm:$0xf]
    %v595 = vld [vmem:[%s1 + $0x30] sm:$0xf]
    %v596 = vld [vmem:[%s1 + $0x34] sm:$0xf]
    %v597 = vld [vmem:[%s1 + $0x38] sm:$0xf]
    %v598 = vld [vmem:[%s1 + $0x3c] sm:$0xf]
    %v599 = vld [vmem:[%s1 + $0x40] sm:$0xf]
    %v600 = vld [vmem:[%s1 + $0x44] sm:$0xf]
    %v601 = vld [vmem:[%s1 + $0x48] sm:$0xf]
    %v602 = vld [vmem:[%s1 + $0x4c] sm:$0xf]
    %v603 = vld [vmem:[%s1 + $0x50] sm:$0xf]
    %v604 = vld [vmem:[%s1 + $0x54] sm:$0xf]
    %v605 = vld [vmem:[%s1 + $0x58] sm:$0xf]
    %v606 = vld [vmem:[%s1 + $0x5c] sm:$0xf]
    %v607 = vld [vmem:[%s1 + $0x60] sm:$0xf]
    %v608 = vld [vmem:[%s1 + $0x64] sm:$0xf]
    %v609 = vld [vmem:[%s1 + $0x68] sm:$0xf]
    %v610 = vld [vmem:[%s1 + $0x6c] sm:$0xf]
    %v611 = vld [vmem:[%s1 + $0x70] sm:$0xf]
    %v612 = vld [vmem:[%s1 + $0x74] sm:$0xf]
    %v613 = vld [vmem:[%s1 + $0x78] sm:$0xf]
    %v614 = vld [vmem:[%s1 + $0x7c] sm:$0xf]
    %v615 = vld [vmem:[%s8] sm:$0xf]
    %v616 = vld [vmem:[%s8 + $0x4] sm:$0xf]
    %v617 = vld [vmem:[%s8 + $0x8] sm:$0xf]
    %v618 = vld [vmem:[%s8 + $0xc] sm:$0xf]
    %v619 = vld [vmem:[%s9] sm:$0x1]
    %v621 = vlaneseq
    %v622 = vshrl.u32 %v621, 7
    %v623 = vsub.s32 0, %v622
    %v624 = vrot.slane %v619, %v623
    %v658 = vunpack.c.l.b16 %v583
    %v659 = vunpack.c.l.b16 %v584
    %v660 = vunpack.c.l.b16 %v585
    %v661 = vunpack.c.l.b16 %v586
    %v662 = vunpack.c.l.b16 %v587
    %v663 = vunpack.c.l.b16 %v588
    %v664 = vunpack.c.l.b16 %v589
    %v665 = vunpack.c.l.b16 %v590
    %v666 = vunpack.c.l.b16 %v591
    %v667 = vunpack.c.l.b16 %v592
    %v668 = vunpack.c.l.b16 %v593
    %v669 = vunpack.c.l.b16 %v594
    %v670 = vunpack.c.l.b16 %v595
    %v671 = vunpack.c.l.b16 %v596
    %v672 = vunpack.c.l.b16 %v597
    %v673 = vunpack.c.l.b16 %v598
    %v674 = vunpack.c.l.b16 %v599
    %v675 = vunpack.c.l.b16 %v600
    %v676 = vunpack.c.l.b16 %v601
    %v677 = vunpack.c.l.b16 %v602
    %v678 = vunpack.c.l.b16 %v603
    %v679 = vunpack.c.l.b16 %v604
    %v680 = vunpack.c.l.b16 %v605
    %v681 = vunpack.c.l.b16 %v606
    %v682 = vunpack.c.l.b16 %v607
    %v683 = vunpack.c.l.b16 %v608
    %v684 = vunpack.c.l.b16 %v609
    %v685 = vunpack.c.l.b16 %v610
    %v686 = vunpack.c.l.b16 %v611
    %v687 = vunpack.c.l.b16 %v612
    %v688 = vunpack.c.l.b16 %v613
    %v689 = vunpack.c.l.b16 %v614
    %v690 = vpack.c.b16 %v659, %v658
    %v691 = vpack.c.b16 %v661, %v660
    %v692 = vpack.c.b16 %v663, %v662
    %v693 = vpack.c.b16 %v665, %v664
    %v694 = vpack.c.b16 %v667, %v666
    %v695 = vpack.c.b16 %v669, %v668
    %v696 = vpack.c.b16 %v671, %v670
    %v697 = vpack.c.b16 %v673, %v672
    %v698 = vpack.c.b16 %v675, %v674
    %v699 = vpack.c.b16 %v677, %v676
    %v700 = vpack.c.b16 %v679, %v678
    %v701 = vpack.c.b16 %v681, %v680
    %v702 = vpack.c.b16 %v683, %v682
    %v703 = vpack.c.b16 %v685, %v684
    %v704 = vpack.c.b16 %v687, %v686
    %v705 = vpack.c.b16 %v689, %v688
    %v710 = vunpack.c.l.b16 %v615
    %v711 = vunpack.c.l.b16 %v616
    %v712 = vunpack.c.l.b16 %v617
    %v713 = vunpack.c.l.b16 %v618
    %v714 = vpack.c.b16 %v711, %v710
    %v715 = vpack.c.b16 %v713, %v712
    %v719 = vsel %vm443, %v690, 0
    %v722 = vsel %vm443, %v691, 0
    %v725 = vsel %vm443, %v692, 0
    %v728 = vsel %vm443, %v693, 0
    %v731 = vsel %vm443, %v694, 0
    %v734 = vsel %vm443, %v695, 0
    %v737 = vsel %vm443, %v696, 0
    %v740 = vsel %vm443, %v697, 0
    %v743 = vsel %vm443, %v698, 0
    %v746 = vsel %vm443, %v699, 0
    %v749 = vsel %vm443, %v700, 0
    %v752 = vsel %vm443, %v701, 0
    %v755 = vsel %vm443, %v702, 0
    %v758 = vsel %vm443, %v703, 0
    %v761 = vsel %vm443, %v704, 0
    %v764 = vsel %vm443, %v705, 0
    %766 = vmatprep.subr.bf16.mxu0 0
    %767 = vmatpush1.bf16.msra.mxu0 %v714
    %768 = vmatprep.subr.bf16.mxu0 0
    %769 = vmatpush1.bf16.msra.mxu0 %v715
    %770 = vmatprep.subr.bf16.mxu0 0
    %771 = vmatpush1.bf16.msra.mxu0 0
    %772 = vmatprep.subr.bf16.mxu0 0
    %773 = vmatpush1.bf16.msra.mxu0 0
    %774 = vmatprep.subr.bf16.mxu0 0
    %775 = vmatpush1.bf16.msra.mxu0 0
    %776 = vmatprep.subr.bf16.mxu0 0
    %777 = vmatpush1.bf16.msra.mxu0 0
    %778 = vmatprep.subr.bf16.mxu0 0
    %779 = vmatpush1.bf16.msra.mxu0 0
    %780 = vmatprep.subr.bf16.mxu0 0
    %781 = vmatpush1.bf16.msra.mxu0 0
    %782 = vmatprep.subr.bf16.mxu0 0
    %783 = vmatpush1.bf16.msra.mxu0 0
    %784 = vmatprep.subr.bf16.mxu0 0
    %785 = vmatpush1.bf16.msra.mxu0 0
    %786 = vmatprep.subr.bf16.mxu0 0
    %787 = vmatpush1.bf16.msra.mxu0 0
    %788 = vmatprep.subr.bf16.mxu0 0
    %789 = vmatpush1.bf16.msra.mxu0 0
    %790 = vmatprep.subr.bf16.mxu0 0
    %791 = vmatpush1.bf16.msra.mxu0 0
    %792 = vmatprep.subr.bf16.mxu0 0
    %793 = vmatpush1.bf16.msra.mxu0 0
    %794 = vmatprep.subr.bf16.mxu0 0
    %795 = vmatpush1.bf16.msra.mxu0 0
    %796 = vmatprep.subr.bf16.mxu0 0
    %797 = vmatpush1.bf16.msra.mxu0 0
    %798 = vmatprep.mubr.bf16.mxu0 0
    %799 = vmatmul.mubr.bf16.gmra.mrb[0].mxu0 %v719
    %v800 = vpop.f32.mrb[0].mxu0
    %v801 = vadd.f32 %v624, %v800
    %v802 = vpop.f32.mrb[0].mxu0
    %v803 = vpop.f32.mrb[0].mxu0
    %v804 = vadd.f32 %v624, %v803
    %v805 = vpop.f32.mrb[0].mxu0
    %806 = vmatprep.mubr.bf16.mxu0 0
    %807 = vmatmul.mubr.bf16.gmra.mrb[0].mxu0 %v722
    %v808 = vpop.f32.mrb[0].mxu0
    %v809 = vadd.f32 %v624, %v808
    %v810 = vpop.f32.mrb[0].mxu0
    %v811 = vpop.f32.mrb[0].mxu0
    %v812 = vadd.f32 %v624, %v811
    %v813 = vpop.f32.mrb[0].mxu0
    %814 = vmatprep.mubr.bf16.mxu0 0
    %815 = vmatmul.mubr.bf16.gmra.mrb[0].mxu0 %v725
    %v816 = vpop.f32.mrb[0].mxu0
    %v817 = vadd.f32 %v624, %v816
    %v818 = vpop.f32.mrb[0].mxu0
    %v819 = vpop.f32.mrb[0].mxu0
    %v820 = vadd.f32 %v624, %v819
    %v821 = vpop.f32.mrb[0].mxu0
    %822 = vmatprep.mubr.bf16.mxu0 0
    %823 = vmatmul.mubr.bf16.gmra.mrb[0].mxu0 %v728
    %v824 = vpop.f32.mrb[0].mxu0
    %v825 = vadd.f32 %v624, %v824
    %v826 = vpop.f32.mrb[0].mxu0
    %v827 = vpop.f32.mrb[0].mxu0
    %v828 = vadd.f32 %v624, %v827
    %v829 = vpop.f32.mrb[0].mxu0
    %830 = vmatprep.mubr.bf16.mxu0 0
    %831 = vmatmul.mubr.bf16.gmra.mrb[0].mxu0 %v731
    %v832 = vpop.f32.mrb[0].mxu0
    %v833 = vadd.f32 %v624, %v832
    %v834 = vpop.f32.mrb[0].mxu0
    %v835 = vpop.f32.mrb[0].mxu0
    %v836 = vadd.f32 %v624, %v835
    %v837 = vpop.f32.mrb[0].mxu0
    %838 = vmatprep.mubr.bf16.mxu0 0
    %839 = vmatmul.mubr.bf16.gmra.mrb[0].mxu0 %v734
    %v840 = vpop.f32.mrb[0].mxu0
    %v841 = vadd.f32 %v624, %v840
    %v842 = vpop.f32.mrb[0].mxu0
    %v843 = vpop.f32.mrb[0].mxu0
    %v844 = vadd.f32 %v624, %v843
    %v845 = vpop.f32.mrb[0].mxu0
    %846 = vmatprep.mubr.bf16.mxu0 0
    %847 = vmatmul.mubr.bf16.gmra.mrb[0].mxu0 %v737
    %v848 = vpop.f32.mrb[0].mxu0
    %v849 = vadd.f32 %v624, %v848
    %v850 = vpop.f32.mrb[0].mxu0
    %v851 = vpop.f32.mrb[0].mxu0
    %v852 = vadd.f32 %v624, %v851
    %v853 = vpop.f32.mrb[0].mxu0
    %854 = vmatprep.mubr.bf16.mxu0 0
    %855 = vmatmul.mubr.bf16.gmra.mrb[0].mxu0 %v740
    %v856 = vpop.f32.mrb[0].mxu0
    %v857 = vadd.f32 %v624, %v856
    %v858 = vpop.f32.mrb[0].mxu0
    %v859 = vpop.f32.mrb[0].mxu0
    %v860 = vadd.f32 %v624, %v859
    %v861 = vpop.f32.mrb[0].mxu0
    %862 = vmatprep.mubr.bf16.mxu0 0
    %863 = vmatmul.mubr.bf16.gmra.mrb[0].mxu0 %v743
    %v864 = vpop.f32.mrb[0].mxu0
    %v865 = vadd.f32 %v624, %v864
    %v866 = vpop.f32.mrb[0].mxu0
    %v867 = vpop.f32.mrb[0].mxu0
    %v868 = vadd.f32 %v624, %v867
    %v869 = vpop.f32.mrb[0].mxu0
    %870 = vmatprep.mubr.bf16.mxu0 0
    %871 = vmatmul.mubr.bf16.gmra.mrb[0].mxu0 %v746
    %v872 = vpop.f32.mrb[0].mxu0
    %v873 = vadd.f32 %v624, %v872
    %v874 = vpop.f32.mrb[0].mxu0
    %v875 = vpop.f32.mrb[0].mxu0
    %v876 = vadd.f32 %v624, %v875
    %v877 = vpop.f32.mrb[0].mxu0
    %878 = vmatprep.mubr.bf16.mxu0 0
    %879 = vmatmul.mubr.bf16.gmra.mrb[0].mxu0 %v749
    %v880 = vpop.f32.mrb[0].mxu0
    %v881 = vadd.f32 %v624, %v880
    %v882 = vpop.f32.mrb[0].mxu0
    %v883 = vpop.f32.mrb[0].mxu0
    %v884 = vadd.f32 %v624, %v883
    %v885 = vpop.f32.mrb[0].mxu0
    %886 = vmatprep.mubr.bf16.mxu0 0
    %887 = vmatmul.mubr.bf16.gmra.mrb[0].mxu0 %v752
    %v888 = vpop.f32.mrb[0].mxu0
    %v889 = vadd.f32 %v624, %v888
    %v890 = vpop.f32.mrb[0].mxu0
    %v891 = vpop.f32.mrb[0].mxu0
    %v892 = vadd.f32 %v624, %v891
    %v893 = vpop.f32.mrb[0].mxu0
    %894 = vmatprep.mubr.bf16.mxu0 0
    %895 = vmatmul.mubr.bf16.gmra.mrb[0].mxu0 %v755
    %v896 = vpop.f32.mrb[0].mxu0
    %v897 = vadd.f32 %v624, %v896
    %v898 = vpop.f32.mrb[0].mxu0
    %v899 = vpop.f32.mrb[0].mxu0
    %v900 = vadd.f32 %v624, %v899
    %v901 = vpop.f32.mrb[0].mxu0
    %902 = vmatprep.mubr.bf16.mxu0 0
    %903 = vmatmul.mubr.bf16.gmra.mrb[0].mxu0 %v758
    %v904 = vpop.f32.mrb[0].mxu0
    %v905 = vadd.f32 %v624, %v904
    %v906 = vpop.f32.mrb[0].mxu0
    %v907 = vpop.f32.mrb[0].mxu0
    %v908 = vadd.f32 %v624, %v907
    %v909 = vpop.f32.mrb[0].mxu0
    %910 = vmatprep.mubr.bf16.mxu0 0
    %911 = vmatmul.mubr.bf16.gmra.mrb[0].mxu0 %v761
    %v912 = vpop.f32.mrb[0].mxu0
    %v913 = vadd.f32 %v624, %v912
    %v914 = vpop.f32.mrb[0].mxu0
    %v915 = vpop.f32.mrb[0].mxu0
    %v916 = vadd.f32 %v624, %v915
    %v917 = vpop.f32.mrb[0].mxu0
    %918 = vmatprep.mubr.bf16.mxu0 0
    %919 = vmatmul.mubr.bf16.gmra.mrb[0].mxu0 %v764
    %v920 = vpop.f32.mrb[0].mxu0
    %v921 = vadd.f32 %v624, %v920
    %v922 = vpop.f32.mrb[0].mxu0
    %v923 = vpop.f32.mrb[0].mxu0
    %v924 = vadd.f32 %v624, %v923
    %v925 = vpop.f32.mrb[0].mxu0
    %926 = vdwg.mxu0
    %v927 = vpack.c.bf16 %v804, %v801
    %v928 = vpack.c.bf16 %v812, %v809
    %v929 = vpack.c.bf16 %v820, %v817
    %v930 = vpack.c.bf16 %v828, %v825
    %v931 = vpack.c.bf16 %v836, %v833
    %v932 = vpack.c.bf16 %v844, %v841
    %v933 = vpack.c.bf16 %v852, %v849
    %v934 = vpack.c.bf16 %v860, %v857
    %v935 = vpack.c.bf16 %v868, %v865
    %v936 = vpack.c.bf16 %v876, %v873
    %v937 = vpack.c.bf16 %v884, %v881
    %v938 = vpack.c.bf16 %v892, %v889
    %v939 = vpack.c.bf16 %v900, %v897
    %v940 = vpack.c.bf16 %v908, %v905
    %v941 = vpack.c.bf16 %v916, %v913
    %v942 = vpack.c.bf16 %v924, %v921
    %v943 = vlaneseq
    %v944 = vshrl.u32 %v943, 7
    %v945 = vld [vmem:[%s2] sm:$0x3]
    %v946 = vlaneseq
    %v947 = vshrl.u32 %v946, 7
    %v948 = vsub.s32 0, %v947
    %v949 = vrot.slane %v945, %v948
    %v950 = vlaneseq
    %v951 = vshrl.u32 %v950, 7
    %v952 = vsub.s32 1, %v951
    %v953 = vrot.slane %v945, %v952
    %vm954 = vcmp.eq.s32.totalorder %v949, %v944
    %vm955 = vcmp.eq.s32.totalorder %v953, %v944
    %v956 = vsel %vm954, 1, 0
    %v957 = vsel %vm955, 1, 0
    %v958 = vcvt.s32.f32 %v956
    %v959 = vcvt.s32.f32 %v957
    %v960 = vlaneseq
    %v961 = vshrl.u32 %v960, 7
    %v962 = vsub.s32 1, %v961
    %v963 = vrot.slane %v581, %v962
    %v964 = vlaneseq
    %v965 = vshrl.u32 %v964, 7
    %v966 = vsub.s32 1, %v965
    %v967 = vrot.slane %v582, %v966
    %v968 = vmul.f32 %v958, %v963
    %v969 = vmul.f32 %v959, %v967
    %v970 = vpack.c.bf16 %v968, %v968
    %v971 = vpack.c.bf16 %v969, %v969
    %972 = vmatprep.subr.bf16.mxu0 0
    %973 = vmatpush1.bf16.msra.mxu0 %v927
    %974 = vmatprep.subr.bf16.mxu0 0
    %975 = vmatpush1.bf16.msra.mxu0 %v928
    %976 = vmatprep.subr.bf16.mxu0 0
    %977 = vmatpush1.bf16.msra.mxu0 %v929
    %978 = vmatprep.subr.bf16.mxu0 0
    %979 = vmatpush1.bf16.msra.mxu0 %v930
    %980 = vmatprep.subr.bf16.mxu0 0
    %981 = vmatpush1.bf16.msra.mxu0 %v931
    %982 = vmatprep.subr.bf16.mxu0 0
    %983 = vmatpush1.bf16.msra.mxu0 %v932
    %984 = vmatprep.subr.bf16.mxu0 0
    %985 = vmatpush1.bf16.msra.mxu0 %v933
    %986 = vmatprep.subr.bf16.mxu0 0
    %987 = vmatpush1.bf16.msra.mxu0 %v934
    %988 = vmatprep.subr.bf16.mxu0 0
    %989 = vmatpush1.bf16.msra.mxu0 %v935
    %990 = vmatprep.subr.bf16.mxu0 0
    %991 = vmatpush1.bf16.msra.mxu0 %v936
    %992 = vmatprep.subr.bf16.mxu0 0
    %993 = vmatpush1.bf16.msra.mxu0 %v937
    %994 = vmatprep.subr.bf16.mxu0 0
    %995 = vmatpush1.bf16.msra.mxu0 %v938
    %996 = vmatprep.subr.bf16.mxu0 0
    %997 = vmatpush1.bf16.msra.mxu0 %v939
    %998 = vmatprep.subr.bf16.mxu0 0
    %999 = vmatpush1.bf16.msra.mxu0 %v940
    %1000 = vmatprep.subr.bf16.mxu0 0
    %1001 = vmatpush1.bf16.msra.mxu0 %v941
    %1002 = vmatprep.subr.bf16.mxu0 0
    %1003 = vmatpush1.bf16.msra.mxu0 %v942
    %1004 = vmatprep.mubr.bf16.mxu0 %v971
    %1005 = vmatmul.mubr.bf16.gmra.mrb[0].mxu0 %v970
    %v1006 = vpop.f32.mrb[0].mxu0
    %v1007 = vadd.f32 0.0, %v1006
    %v1008 = vpop.f32.mrb[0].mxu0
    %v1009 = vpop.f32.mrb[0].mxu0
    %v1010 = vpop.f32.mrb[0].mxu0
    %1011 = vdwg.mxu0
    %v1012 = vpack.c.bf16 %v958, %v958
    %v1013 = vpack.c.bf16 %v959, %v959
    %1014 = vmatprep.subr.bf16.mxu0 0
    %1015 = vmatpush1.bf16.msra.mxu0 %v927
    %1016 = vmatprep.subr.bf16.mxu0 0
    %1017 = vmatpush1.bf16.msra.mxu0 %v928
    %1018 = vmatprep.subr.bf16.mxu0 0
    %1019 = vmatpush1.bf16.msra.mxu0 %v929
    %1020 = vmatprep.subr.bf16.mxu0 0
    %1021 = vmatpush1.bf16.msra.mxu0 %v930
    %1022 = vmatprep.subr.bf16.mxu0 0
    %1023 = vmatpush1.bf16.msra.mxu0 %v931
    %1024 = vmatprep.subr.bf16.mxu0 0
    %1025 = vmatpush1.bf16.msra.mxu0 %v932
    %1026 = vmatprep.subr.bf16.mxu0 0
    %1027 = vmatpush1.bf16.msra.mxu0 %v933
    %1028 = vmatprep.subr.bf16.mxu0 0
    %1029 = vmatpush1.bf16.msra.mxu0 %v934
    %1030 = vmatprep.subr.bf16.mxu0 0
    %1031 = vmatpush1.bf16.msra.mxu0 %v935
    %1032 = vmatprep.subr.bf16.mxu0 0
    %1033 = vmatpush1.bf16.msra.mxu0 %v936
    %1034 = vmatprep.subr.bf16.mxu0 0
    %1035 = vmatpush1.bf16.msra.mxu0 %v937
    %1036 = vmatprep.subr.bf16.mxu0 0
    %1037 = vmatpush1.bf16.msra.mxu0 %v938
    %1038 = vmatprep.subr.bf16.mxu0 0
    %1039 = vmatpush1.bf16.msra.mxu0 %v939
    %1040 = vmatprep.subr.bf16.mxu0 0
    %1041 = vmatpush1.bf16.msra.mxu0 %v940
    %1042 = vmatprep.subr.bf16.mxu0 0
    %1043 = vmatpush1.bf16.msra.mxu0 %v941
    %1044 = vmatprep.subr.bf16.mxu0 0
    %1045 = vmatpush1.bf16.msra.mxu0 %v942
    %1046 = vmatprep.mubr.bf16.mxu0 %v1013
    %1047 = vmatmul.mubr.bf16.gmra.mrb[0].mxu0 %v1012
    %v1048 = vpop.f32.mrb[0].mxu0
    %v1049 = vadd.f32 0.0, %v1048
    %v1050 = vpop.f32.mrb[0].mxu0
    %v1051 = vpop.f32.mrb[0].mxu0
    %v1052 = vpop.f32.mrb[0].mxu0
    %1053 = vdwg.mxu0
    %vm1054 = vcmask 1043456
    %v1055 = vsel %vm1054, %v968, 0.0
    %v1056 = vsel %vm1054, %v969, 0.0
    %v1057 = vadd.f32 %v1055, %v1056
    %1058 = vadd.xlane.f32.xlu0 %v1057
    %v1059 = vpop.xlane.xlu0 %1058
    %v1060 = vsel %vm1054, %v958, 0.0
    %v1061 = vsel %vm1054, %v959, 0.0
    %v1062 = vadd.f32 %v1060, %v1061
    %1063 = vadd.xlane.f32.xlu0 %v1062
    %v1064 = vpop.xlane.xlu0 %1063
    %v1065 = vld [vmem:[#allocation2] sm:$0xf]
    %v1066 = vadd.f32 %v1065, %v1007
    %vm1067 = vcmask 257024
    %1068 = vst.msk [vmem:[#allocation2] sm:$0xf] %vm1067, %v1066
    %v1069 = vld [vmem:[#allocation4] sm:$0xf]
    %v1070 = vadd.f32 %v1069, %v1049
    %1071 = vst.msk [vmem:[#allocation4] sm:$0xf] %vm1067, %v1070
    %v1072 = vld [vmem:[%s12] sm:$0xf]
    %vm1073 = vcmask 7168
    %v1074 = vsel %vm1073, %v1059, %v1064
    %v1075 = vadd.f32 %v1072, %v1074
    %vm1076 = vcmask 11264
    %1077 = vst.msk [vmem:[%s12] sm:$0xf] %vm1076, %v1075
    // Predicated region
    $region46: #{tpu_custom_call.1} parent=1 // pred_check
      %p1078 = pneg %p42
    $region47: #{tpu_custom_call.1} parent=1 // pred_check_branch
      %1080 = sbr.rel (%p1078) target = $region49
    $region48: #{tpu_custom_call.1} parent=1 // pred_region
      %v1081 = vld [vmem:[#allocation2] sm:$0xf]
      %v1082 = vld [vmem:[#allocation4] sm:$0xf]
      %v1083 = vld [vmem:[%s12] sm:$0xf]
      %v1084 = vmax.f32 %v1083, 1.0
      %v1085 = vrcp.pop %v1084
      %1087 = vset.pattern.permute.xlu0 1
      %1088 = vperm.xlu0 %1087, %v1085
      %v1089 = vpop.permute.xlu0 %1088
      %v1091 = vmul.f32 %v1081, %v1089
      %1092 = vst.msk [vmem:[#allocation2] sm:$0xf] %vm1067, %v1091
      %v1093 = vsub.f32 %v1082, %v1081
      %v1094 = vmul.f32 %v1093, %v1089
      %1095 = vst.msk [vmem:[#allocation4] sm:$0xf] %vm1067, %v1094
    $region49: #{tpu_custom_call.1} parent=1 // pred_fallthru
      _
    // Predicated region
    $region50: #{tpu_custom_call.1} parent=1 // pred_check
      _
    $region51: #{tpu_custom_call.1} parent=1 // pred_check_branch
      %1097 = sbr.rel (0) target = $region53
    $region52: #{tpu_custom_call.1} parent=1 // pred_region
      %s1099 = ssub.s32 64, 64
      %1100 = vsyncadd [#allocation3], %s1099
      %s1102 = sshll.u32 [#allocation2], 4
      %s1103 = int_to_ptr.vmem [resolvable:$true] %s1102
      %1105 = dma.vmem_to_hbm [thread:$0]  %s1103, 64, %s10, [#allocation3]
    $region53: #{tpu_custom_call.1} parent=1 // pred_fallthru
      _
    // Predicated region
    $region54: #{tpu_custom_call.1} parent=1 // pred_check
      _
    $region55: #{tpu_custom_call.1} parent=1 // pred_check_branch
      %1107 = sbr.rel (0) target = $region57
    $region56: #{tpu_custom_call.1} parent=1 // pred_region
      %s1109 = ssub.s32 64, 64
      %1110 = vsyncadd [#allocation5], %s1109
      %s1112 = sshll.u32 [#allocation4], 4
      %s1113 = int_to_ptr.vmem [resolvable:$true] %s1112
      %1115 = dma.vmem_to_hbm [thread:$0]  %s1113, 64, %s11, [#allocation5]
    $region57: #{tpu_custom_call.1} parent=1 // pred_fallthru
      _
    // Predicated region
    $region58: #{tpu_custom_call.1} parent=1 // pred_check
      _
    $region59: #{tpu_custom_call.1} parent=1 // pred_check_branch
      %1117 = sbr.rel (0) target = $region61
    $region60: #{tpu_custom_call.1} parent=1 // pred_region
      _
    $region61: #{tpu_custom_call.1} parent=1 // pred_fallthru
      _
    // Predicated region
    $region62: #{tpu_custom_call.1} parent=1 // pred_check
      _
    $region63: #{tpu_custom_call.1} parent=1 // pred_check_branch
      %1119 = sbr.rel (0) target = $region65
    $region64: #{tpu_custom_call.1} parent=1 // pred_region
      %s1121 = ssub.s32 32, 32
      %1122 = vsyncadd [#allocation5], %s1121
      %s1124 = sshll.u32 [#allocation6], 4
      %s1125 = int_to_ptr.vmem [resolvable:$true] %s1124
      %1127 = dma.vmem_to_hbm [thread:$0]  %s1125, 32, %s13, [#allocation5]
    $region65: #{tpu_custom_call.1} parent=1 // pred_fallthru
      _
    // Predicated region
    $region66: #{tpu_custom_call.1} parent=1 // pred_check
      _
    $region67: #{tpu_custom_call.1} parent=1 // pred_check_branch
      %1129 = sbr.rel (0) target = $region69
    $region68: #{tpu_custom_call.1} parent=1 // pred_region
      %1130 = dma.done [#allocation3], 64
    $region69: #{tpu_custom_call.1} parent=1 // pred_fallthru
      _
    // Predicated region
    $region70: #{tpu_custom_call.1} parent=1 // pred_check
      _
    $region71: #{tpu_custom_call.1} parent=1 // pred_check_branch
      %1132 = sbr.rel (0) target = $region73
    $region72: #{tpu_custom_call.1} parent=1 // pred_region
      %1133 = dma.done [#allocation5], 64
    $region73: #{tpu_custom_call.1} parent=1 // pred_fallthru
      _
    // Predicated region
    $region74: #{tpu_custom_call.1} parent=1 // pred_check
      _
    $region75: #{tpu_custom_call.1} parent=1 // pred_check_branch
      %1135 = sbr.rel (0) target = $region77
    $region76: #{tpu_custom_call.1} parent=1 // pred_region
      _
    $region77: #{tpu_custom_call.1} parent=1 // pred_fallthru
      _
    // Predicated region
    $region78: #{tpu_custom_call.1} parent=1 // pred_check
      _
    $region79: #{tpu_custom_call.1} parent=1 // pred_check_branch
      %1137 = sbr.rel (0) target = $region81
    $region80: #{tpu_custom_call.1} parent=1 // pred_region
      %1138 = dma.done [#allocation5], 32
    $region81: #{tpu_custom_call.1} parent=1 // pred_fallthru
      _
    %1139 = vsyncpa [#allocation3], 1
    %1140 = vsyncpa [#allocation5], 1

</llo_original>
